<compile_context>
chip_gen: v5e
topology: v5e:2x2
jax: 0.10.0
libtpu: 0.0.40
codegen_flags: <defaults>
</compile_context>

<pallas_src>
import numpy as np
import jax
import jax.numpy as jnp
from jax import lax
from jax.experimental import pallas as pl
from jax.experimental.pallas import tpu as pltpu

BN_EPS = 1e-5


def _make_basic_conv_kernel(c_in, c_out, L, ksize, pad, relu):
    """Kernel for one (TB, C_in*L) -> (TB, C_out*L) block (batch on sublanes)."""

    def kernel(w_ref, bias_ref, x_ref, o_ref):
        # w_ref   : SMEM f32[C_out*C_in*K]  conv weights with BN scale folded in
        # bias_ref: SMEM f32[C_out]         folded bias (BN beta/mean + conv bias)
        # x_ref   : VMEM (TB, C_in*L)       input dtype (f32 or bf16)
        # o_ref   : VMEM (TB, C_out*L)
        x = x_ref[...]                                  # native dtype; no eager f32 upcast
        tb = x.shape[0]
        CL = c_in * L

        # Lane index within a channel (shape (1, C*L); broadcasts over sublanes).
        lane_in_ch = lax.broadcasted_iota(jnp.int32, (1, CL), 1) % L

        # One f32 accumulator per output channel; (TB, L) slabs -> full sublane
        # occupancy since the batch is packed on sublanes.
        accs = [jnp.zeros((tb, L), jnp.float32) for _ in range(c_out)]

        # Shift-and-accumulate conv: ONE roll of the whole (TB, C_in*L) row and
        # ONE boundary mask per tap, shared by every batch row / channel pair.
        zero = jnp.zeros((), x.dtype)
        for k in range(ksize):
            s = k - pad                                 # out[l] needs x[l + s]
            if s == 0:
                xk = x
            else:
                shifted = pltpu.roll(x, (-s) % CL, axis=1)   # shifted[j] = x[(j+s) % CL]
                valid = jnp.logical_and(lane_in_ch + s >= 0, lane_in_ch + s < L)
                xk = jnp.where(valid, shifted, zero)    # zero padding + no cross-channel bleed
            for ci in range(c_in):
                xk_ci = xk[:, ci * L:(ci + 1) * L].astype(jnp.float32)   # (TB, L) lane slice
                for co in range(c_out):
                    w = w_ref[(co * c_in + ci) * ksize + k]
                    accs[co] = accs[co] + w * xk_ci

        # Epilogue: folded bias (+ optional ReLU), then ONE dense full-block store.
        parts = []
        for co in range(c_out):
            y = accs[co] + bias_ref[co]
            if relu:
                y = jnp.maximum(y, 0.0)
            parts.append(y)
        o_ref[...] = jnp.concatenate(parts, axis=1).astype(o_ref.dtype)

    return kernel


def _vmem_capacity_bytes():
    try:
        return int(pltpu.get_tpu_info().vmem_capacity_bytes)
    except Exception:
        return 64 << 20        # conservative: v7x per-TensorCore VMEM


def _num_tensorcores():
    try:
        kind = (jax.devices()[0].device_kind or "").lower()
        if "v7" in kind:
            return 2
    except Exception:
        pass
    return 1                   # v5e / v6e: single TensorCore per chip


def _pick_block_batch(n, per_row_bytes, budget_bytes, num_cores):
    """Largest batch tile TB (multiple of 8, or the full batch) dividing n whose
    estimated resident footprint fits the budget.  On multi-TensorCore chips
    prefer an even split of grid steps across cores."""
    cands = sorted({d for d in range(8, n + 1, 8) if n % d == 0} | {n})
    fitting = [d for d in cands if d * per_row_bytes <= budget_bytes]
    if not fitting:
        fitting = [min(cands)]
    if num_cores > 1:
        balanced = [d for d in fitting if (n // d) % num_cores == 0]
        if balanced:
            return max(balanced)
    return max(fitting)


def basic_conv(x, conv_w, *, padding, conv_b=None, bn_stats=None, relu=True,
               eps=BN_EPS, block_batch=None):
    """BasicConv forward: Conv1d (stride=1, groups=1, dilation=1, 'same'
    padding, bias optional) -> BatchNorm1d (eval mode) -> optional ReLU.

    x        : (N, C_in, L)
    conv_w   : (C_out, C_in, K)
    conv_b   : optional (C_out,)
    bn_stats : optional (gamma, beta, running_mean, running_var), each (C_out,)
    """
    N, C_in, L = x.shape
    C_out, c_in_w, K = conv_w.shape
    if c_in_w != C_in:
        raise ValueError("conv weight in-channel mismatch")
    if 2 * padding != K - 1:
        raise NotImplementedError("only 'same' stride-1 convolution is supported")

    # Fold BN (eval mode) into the conv weights (scale) and a per-channel bias.
    if bn_stats is not None:
        gamma, beta, mean, var = bn_stats
        scale = gamma.astype(jnp.float32) * lax.rsqrt(var.astype(jnp.float32) + eps)
        bias = beta.astype(jnp.float32) - mean.astype(jnp.float32) * scale
        if conv_b is not None:
            bias = bias + conv_b.astype(jnp.float32) * scale
    else:
        scale = jnp.ones((C_out,), jnp.float32)
        bias = (conv_b.astype(jnp.float32) if conv_b is not None
                else jnp.zeros((C_out,), jnp.float32))
    w_folded = conv_w.astype(jnp.float32) * scale[:, None, None]
    w_flat = w_folded.reshape(-1)

    # Free reshape for contiguous NCW: batch -> sublanes, channel*length -> lanes.
    x2d = x.reshape(N, C_in * L)

    # VMEM accounting (per batch row): double-buffered in/out blocks, f32
    # accumulators, per-tap rolled/masked temporary and the loaded x block.
    eb = jnp.dtype(x.dtype).itemsize
    per_row_bytes = L * (2 * C_in * eb          # input block, double-buffered
                         + 2 * C_out * eb       # output block, double-buffered
                         + 4 * C_out            # f32 accumulators
                         + 4 * C_in             # per-tap shifted/masked temp
                         + C_in * eb)           # loaded x live copy
    capacity = _vmem_capacity_bytes()
    budget = max(4 << 20, (capacity * 3) // 8)  # ~48 MiB on 128-MiB chips, ~24 MiB on v7x
    num_cores = _num_tensorcores()
    TB = (block_batch if block_batch is not None
          else _pick_block_batch(N, per_row_bytes, budget, num_cores))
    if N % TB != 0:
        raise ValueError("block_batch must divide the batch size")
    grid = (N // TB,)

    need = TB * per_row_bytes
    vmem_limit = int(min(max(32 << 20, 2 * need), max(capacity - (8 << 20), 32 << 20)))

    kernel = _make_basic_conv_kernel(C_in, C_out, L, K, padding, relu)

    out2d = pl.pallas_call(
        kernel,
        out_shape=jax.ShapeDtypeStruct((N, C_out * L), x.dtype),
        grid_spec=pltpu.PrefetchScalarGridSpec(
            num_scalar_prefetch=0,
            grid=grid,
            in_specs=[
                pl.BlockSpec(memory_space=pltpu.MemorySpace.SMEM),   # folded conv weights
                pl.BlockSpec(memory_space=pltpu.MemorySpace.SMEM),   # folded bias
                pl.BlockSpec((TB, C_in * L), lambda n: (n, 0)),
            ],
            out_specs=pl.BlockSpec((TB, C_out * L), lambda n: (n, 0)),
        ),
        compiler_params=pltpu.CompilerParams(
            dimension_semantics=("parallel",),
            vmem_limit_bytes=vmem_limit,
        ),
    )(w_flat, bias, x2d)
    return out2d.reshape(N, C_out, L)


def basic_conv_ref(x, conv_w, *, padding, conv_b=None, bn_stats=None, relu=True,
                   eps=BN_EPS):
    """Pure-JAX reference for verification."""
    y = lax.conv_general_dilated(
        x.astype(jnp.float32), conv_w.astype(jnp.float32),
        window_strides=(1,), padding=[(padding, padding)],
        dimension_numbers=("NCH", "OIH", "NCH"))
    if conv_b is not None:
        y = y + conv_b[None, :, None]
    if bn_stats is not None:
        gamma, beta, mean, var = bn_stats
        y = ((y - mean[None, :, None]) * lax.rsqrt(var + eps)[None, :, None]
             * gamma[None, :, None] + beta[None, :, None])
    if relu:
        y = jnp.maximum(y, 0.0)
    return y.astype(x.dtype)


if __name__ == "__main__":
    key = jax.random.PRNGKey(0)

    def run_case(case_key, N, C_in, C_out, K, pad, L, relu, use_bn=True, use_bias=False):
        kx, kw, kg, kb, km, kv, kc = jax.random.split(case_key, 7)
        x = jax.random.normal(kx, (N, C_in, L), dtype=jnp.float32)
        conv_w = 0.1 * jax.random.normal(kw, (C_out, C_in, K), dtype=jnp.float32)
        conv_b = (0.1 * jax.random.normal(kc, (C_out,), dtype=jnp.float32)
                  if use_bias else None)
        bn_stats = None
        if use_bn:
            gamma = 1.0 + 0.1 * jax.random.normal(kg, (C_out,), dtype=jnp.float32)
            beta = 0.1 * jax.random.normal(kb, (C_out,), dtype=jnp.float32)
            mean = 0.1 * jax.random.normal(km, (C_out,), dtype=jnp.float32)
            var = jax.random.uniform(kv, (C_out,), dtype=jnp.float32,
                                     minval=0.5, maxval=1.5)
            bn_stats = (gamma, beta, mean, var)

        out = jax.block_until_ready(
            basic_conv(x, conv_w, padding=pad, conv_b=conv_b,
                       bn_stats=bn_stats, relu=relu))
        ref = jax.block_until_ready(
            basic_conv_ref(x, conv_w, padding=pad, conv_b=conv_b,
                           bn_stats=bn_stats, relu=relu))
        np.testing.assert_allclose(np.asarray(out), np.asarray(ref),
                                   rtol=1e-4, atol=1e-5)

    k1, k2, k3 = jax.random.split(key, 3)
    # Generic BasicConv(4, 8, kernel_size=3, padding=1) with defaults (bn=True, relu=True).
    run_case(k1, N=8, C_in=4, C_out=8, K=3, pad=1, L=128, relu=True)
    # CBAM_1D spatial-gate config: BasicConv(2, 1, kernel_size=7, padding=3, relu=False).
    run_case(k2, N=8, C_in=2, C_out=1, K=7, pad=3, L=256, relu=False)
    # bias=True, bn=False path; batch not a multiple of 8 (full-batch block).
    run_case(k3, N=4, C_in=4, C_out=8, K=3, pad=1, L=128, relu=True,
             use_bn=False, use_bias=True)

    print("KERNEL_OK")
</pallas_src>

<mosaic_0001>
module attributes {stable_mosaic.version = 11 : i64} {
  func.func @kernel(%arg0: i32, %arg1: memref<96xf32, #tpu.memory_space<smem>>, %arg2: memref<8xf32, #tpu.memory_space<smem>>, %arg3: memref<8x512xf32, #tpu.memory_space<vmem>>, %arg4: memref<8x1024xf32, #tpu.memory_space<vmem>>) attributes {dimension_semantics = [#tpu.dimension_semantics<parallel>], iteration_bounds = array<i64: 1>, scalar_prefetch = 0 : i64, scratch_operands = 0 : i64, tpu.core_type = #tpu.core_type<tc>, window_params = [{transform_indices = @transform_0, window_bounds = array<i64: 96>}, {transform_indices = @transform_1, window_bounds = array<i64: 8>}, {transform_indices = @transform_2, window_bounds = array<i64: 8, 512>}, {transform_indices = @transform_3, window_bounds = array<i64: 8, 1024>}]} {
    %c0 = arith.constant 0 : index
    %c0_0 = arith.constant 0 : index
    %0 = vector.load %arg3[%c0, %c0_0] : memref<8x512xf32, #tpu.memory_space<vmem>>, vector<8x512xf32>
    %1 = tpu.iota {dimensions = array<i32: 1>} : vector<1x512xi32>
    %c128_i32 = arith.constant 128 : i32
    %c0_i32 = arith.constant 0 : i32
    %2 = arith.cmpi eq, %c128_i32, %c0_i32 : i32
    %c1_i32 = arith.constant 1 : i32
    %3 = arith.select %2, %c1_i32, %c128_i32 : i32
    %4 = vector.broadcast %3 : i32 to vector<1x512xi32>
    %5 = arith.remsi %1, %4 : vector<1x512xi32>
    %c0_i32_1 = arith.constant 0 : i32
    %6 = vector.broadcast %c0_i32_1 : i32 to vector<1x512xi32>
    %7 = arith.cmpi ne, %5, %6 : vector<1x512xi32>
    %c0_i32_2 = arith.constant 0 : i32
    %8 = vector.broadcast %c0_i32_2 : i32 to vector<1x512xi32>
    %9 = arith.cmpi slt, %5, %8 : vector<1x512xi32>
    %c0_i32_3 = arith.constant 0 : i32
    %10 = arith.cmpi slt, %3, %c0_i32_3 : i32
    %11 = vector.broadcast %10 : i1 to vector<1x512xi1>
    %12 = vector.broadcast %11 : vector<1x512xi1> to vector<1x512xi1>
    %13 = arith.xori %9, %12 : vector<1x512xi1>
    %14 = arith.andi %13, %7 : vector<1x512xi1>
    %15 = vector.broadcast %3 : i32 to vector<1x512xi32>
    %16 = arith.addi %5, %15 : vector<1x512xi32>
    %17 = arith.select %14, %16, %5 : vector<1x512xi1>, vector<1x512xi32>
    %cst = arith.constant 0.000000e+00 : f32
    %18 = vector.broadcast %cst : f32 to vector<8x128xf32>
    %cst_4 = arith.constant 0.000000e+00 : f32
    %19 = vector.broadcast %cst_4 : f32 to vector<8x128xf32>
    %cst_5 = arith.constant 0.000000e+00 : f32
    %20 = vector.broadcast %cst_5 : f32 to vector<8x128xf32>
    %cst_6 = arith.constant 0.000000e+00 : f32
    %21 = vector.broadcast %cst_6 : f32 to vector<8x128xf32>
    %cst_7 = arith.constant 0.000000e+00 : f32
    %22 = vector.broadcast %cst_7 : f32 to vector<8x128xf32>
    %cst_8 = arith.constant 0.000000e+00 : f32
    %23 = vector.broadcast %cst_8 : f32 to vector<8x128xf32>
    %cst_9 = arith.constant 0.000000e+00 : f32
    %24 = vector.broadcast %cst_9 : f32 to vector<8x128xf32>
    %cst_10 = arith.constant 0.000000e+00 : f32
    %25 = vector.broadcast %cst_10 : f32 to vector<8x128xf32>
    %c1_i32_11 = arith.constant 1 : i32
    %26 = tpu.dynamic_rotate %0 by %c1_i32_11 dim 1 : vector<8x512xf32>, i32 -> vector<8x512xf32>
    %c-1_i32 = arith.constant -1 : i32
    %27 = vector.broadcast %c-1_i32 : i32 to vector<1x512xi32>
    %28 = arith.addi %17, %27 : vector<1x512xi32>
    %c0_i32_12 = arith.constant 0 : i32
    %29 = vector.broadcast %c0_i32_12 : i32 to vector<1x512xi32>
    %30 = arith.cmpi sge, %28, %29 : vector<1x512xi32>
    %c-1_i32_13 = arith.constant -1 : i32
    %31 = vector.broadcast %c-1_i32_13 : i32 to vector<1x512xi32>
    %32 = arith.addi %17, %31 : vector<1x512xi32>
    %c128_i32_14 = arith.constant 128 : i32
    %33 = vector.broadcast %c128_i32_14 : i32 to vector<1x512xi32>
    %34 = arith.cmpi slt, %32, %33 : vector<1x512xi32>
    %35 = arith.andi %30, %34 : vector<1x512xi1>
    %cst_15 = arith.constant 0.000000e+00 : f32
    %36 = vector.shape_cast %35 : vector<1x512xi1> to vector<1x512xi1>
    %37 = vector.broadcast %36 : vector<1x512xi1> to vector<8x512xi1>
    %38 = vector.broadcast %cst_15 : f32 to vector<8x512xf32>
    %39 = arith.select %37, %26, %38 : vector<8x512xi1>, vector<8x512xf32>
    %40 = vector.extract_strided_slice %39 {offsets = [0, 0], sizes = [8, 128], strides = [1, 1]} : vector<8x512xf32> to vector<8x128xf32>
    %c0_16 = arith.constant 0 : index
    %41 = memref.load %arg1[%c0_16] : memref<96xf32, #tpu.memory_space<smem>>
    %42 = vector.broadcast %41 : f32 to vector<8x128xf32>
    %43 = arith.mulf %42, %40 : vector<8x128xf32>
    %44 = arith.addf %18, %43 : vector<8x128xf32>
    %c12 = arith.constant 12 : index
    %45 = memref.load %arg1[%c12] : memref<96xf32, #tpu.memory_space<smem>>
    %46 = vector.broadcast %45 : f32 to vector<8x128xf32>
    %47 = arith.mulf %46, %40 : vector<8x128xf32>
    %48 = arith.addf %19, %47 : vector<8x128xf32>
    %c24 = arith.constant 24 : index
    %49 = memref.load %arg1[%c24] : memref<96xf32, #tpu.memory_space<smem>>
    %50 = vector.broadcast %49 : f32 to vector<8x128xf32>
    %51 = arith.mulf %50, %40 : vector<8x128xf32>
    %52 = arith.addf %20, %51 : vector<8x128xf32>
    %c36 = arith.constant 36 : index
    %53 = memref.load %arg1[%c36] : memref<96xf32, #tpu.memory_space<smem>>
    %54 = vector.broadcast %53 : f32 to vector<8x128xf32>
    %55 = arith.mulf %54, %40 : vector<8x128xf32>
    %56 = arith.addf %21, %55 : vector<8x128xf32>
    %c48 = arith.constant 48 : index
    %57 = memref.load %arg1[%c48] : memref<96xf32, #tpu.memory_space<smem>>
    %58 = vector.broadcast %57 : f32 to vector<8x128xf32>
    %59 = arith.mulf %58, %40 : vector<8x128xf32>
    %60 = arith.addf %22, %59 : vector<8x128xf32>
    %c60 = arith.constant 60 : index
    %61 = memref.load %arg1[%c60] : memref<96xf32, #tpu.memory_space<smem>>
    %62 = vector.broadcast %61 : f32 to vector<8x128xf32>
    %63 = arith.mulf %62, %40 : vector<8x128xf32>
    %64 = arith.addf %23, %63 : vector<8x128xf32>
    %c72 = arith.constant 72 : index
    %65 = memref.load %arg1[%c72] : memref<96xf32, #tpu.memory_space<smem>>
    %66 = vector.broadcast %65 : f32 to vector<8x128xf32>
    %67 = arith.mulf %66, %40 : vector<8x128xf32>
    %68 = arith.addf %24, %67 : vector<8x128xf32>
    %c84 = arith.constant 84 : index
    %69 = memref.load %arg1[%c84] : memref<96xf32, #tpu.memory_space<smem>>
    %70 = vector.broadcast %69 : f32 to vector<8x128xf32>
    %71 = arith.mulf %70, %40 : vector<8x128xf32>
    %72 = arith.addf %25, %71 : vector<8x128xf32>
    %73 = vector.extract_strided_slice %39 {offsets = [0, 128], sizes = [8, 128], strides = [1, 1]} : vector<8x512xf32> to vector<8x128xf32>
    %c3 = arith.constant 3 : index
    %74 = memref.load %arg1[%c3] : memref<96xf32, #tpu.memory_space<smem>>
    %75 = vector.broadcast %74 : f32 to vector<8x128xf32>
    %76 = arith.mulf %75, %73 : vector<8x128xf32>
    %77 = arith.addf %44, %76 : vector<8x128xf32>
    %c15 = arith.constant 15 : index
    %78 = memref.load %arg1[%c15] : memref<96xf32, #tpu.memory_space<smem>>
    %79 = vector.broadcast %78 : f32 to vector<8x128xf32>
    %80 = arith.mulf %79, %73 : vector<8x128xf32>
    %81 = arith.addf %48, %80 : vector<8x128xf32>
    %c27 = arith.constant 27 : index
    %82 = memref.load %arg1[%c27] : memref<96xf32, #tpu.memory_space<smem>>
    %83 = vector.broadcast %82 : f32 to vector<8x128xf32>
    %84 = arith.mulf %83, %73 : vector<8x128xf32>
    %85 = arith.addf %52, %84 : vector<8x128xf32>
    %c39 = arith.constant 39 : index
    %86 = memref.load %arg1[%c39] : memref<96xf32, #tpu.memory_space<smem>>
    %87 = vector.broadcast %86 : f32 to vector<8x128xf32>
    %88 = arith.mulf %87, %73 : vector<8x128xf32>
    %89 = arith.addf %56, %88 : vector<8x128xf32>
    %c51 = arith.constant 51 : index
    %90 = memref.load %arg1[%c51] : memref<96xf32, #tpu.memory_space<smem>>
    %91 = vector.broadcast %90 : f32 to vector<8x128xf32>
    %92 = arith.mulf %91, %73 : vector<8x128xf32>
    %93 = arith.addf %60, %92 : vector<8x128xf32>
    %c63 = arith.constant 63 : index
    %94 = memref.load %arg1[%c63] : memref<96xf32, #tpu.memory_space<smem>>
    %95 = vector.broadcast %94 : f32 to vector<8x128xf32>
    %96 = arith.mulf %95, %73 : vector<8x128xf32>
    %97 = arith.addf %64, %96 : vector<8x128xf32>
    %c75 = arith.constant 75 : index
    %98 = memref.load %arg1[%c75] : memref<96xf32, #tpu.memory_space<smem>>
    %99 = vector.broadcast %98 : f32 to vector<8x128xf32>
    %100 = arith.mulf %99, %73 : vector<8x128xf32>
    %101 = arith.addf %68, %100 : vector<8x128xf32>
    %c87 = arith.constant 87 : index
    %102 = memref.load %arg1[%c87] : memref<96xf32, #tpu.memory_space<smem>>
    %103 = vector.broadcast %102 : f32 to vector<8x128xf32>
    %104 = arith.mulf %103, %73 : vector<8x128xf32>
    %105 = arith.addf %72, %104 : vector<8x128xf32>
    %106 = vector.extract_strided_slice %39 {offsets = [0, 256], sizes = [8, 128], strides = [1, 1]} : vector<8x512xf32> to vector<8x128xf32>
    %c6 = arith.constant 6 : index
    %107 = memref.load %arg1[%c6] : memref<96xf32, #tpu.memory_space<smem>>
    %108 = vector.broadcast %107 : f32 to vector<8x128xf32>
    %109 = arith.mulf %108, %106 : vector<8x128xf32>
    %110 = arith.addf %77, %109 : vector<8x128xf32>
    %c18 = arith.constant 18 : index
    %111 = memref.load %arg1[%c18] : memref<96xf32, #tpu.memory_space<smem>>
    %112 = vector.broadcast %111 : f32 to vector<8x128xf32>
    %113 = arith.mulf %112, %106 : vector<8x128xf32>
    %114 = arith.addf %81, %113 : vector<8x128xf32>
    %c30 = arith.constant 30 : index
    %115 = memref.load %arg1[%c30] : memref<96xf32, #tpu.memory_space<smem>>
    %116 = vector.broadcast %115 : f32 to vector<8x128xf32>
    %117 = arith.mulf %116, %106 : vector<8x128xf32>
    %118 = arith.addf %85, %117 : vector<8x128xf32>
    %c42 = arith.constant 42 : index
    %119 = memref.load %arg1[%c42] : memref<96xf32, #tpu.memory_space<smem>>
    %120 = vector.broadcast %119 : f32 to vector<8x128xf32>
    %121 = arith.mulf %120, %106 : vector<8x128xf32>
    %122 = arith.addf %89, %121 : vector<8x128xf32>
    %c54 = arith.constant 54 : index
    %123 = memref.load %arg1[%c54] : memref<96xf32, #tpu.memory_space<smem>>
    %124 = vector.broadcast %123 : f32 to vector<8x128xf32>
    %125 = arith.mulf %124, %106 : vector<8x128xf32>
    %126 = arith.addf %93, %125 : vector<8x128xf32>
    %c66 = arith.constant 66 : index
    %127 = memref.load %arg1[%c66] : memref<96xf32, #tpu.memory_space<smem>>
    %128 = vector.broadcast %127 : f32 to vector<8x128xf32>
    %129 = arith.mulf %128, %106 : vector<8x128xf32>
    %130 = arith.addf %97, %129 : vector<8x128xf32>
    %c78 = arith.constant 78 : index
    %131 = memref.load %arg1[%c78] : memref<96xf32, #tpu.memory_space<smem>>
    %132 = vector.broadcast %131 : f32 to vector<8x128xf32>
    %133 = arith.mulf %132, %106 : vector<8x128xf32>
    %134 = arith.addf %101, %133 : vector<8x128xf32>
    %c90 = arith.constant 90 : index
    %135 = memref.load %arg1[%c90] : memref<96xf32, #tpu.memory_space<smem>>
    %136 = vector.broadcast %135 : f32 to vector<8x128xf32>
    %137 = arith.mulf %136, %106 : vector<8x128xf32>
    %138 = arith.addf %105, %137 : vector<8x128xf32>
    %139 = vector.extract_strided_slice %39 {offsets = [0, 384], sizes = [8, 128], strides = [1, 1]} : vector<8x512xf32> to vector<8x128xf32>
    %c9 = arith.constant 9 : index
    %140 = memref.load %arg1[%c9] : memref<96xf32, #tpu.memory_space<smem>>
    %141 = vector.broadcast %140 : f32 to vector<8x128xf32>
    %142 = arith.mulf %141, %139 : vector<8x128xf32>
    %143 = arith.addf %110, %142 : vector<8x128xf32>
    %c21 = arith.constant 21 : index
    %144 = memref.load %arg1[%c21] : memref<96xf32, #tpu.memory_space<smem>>
    %145 = vector.broadcast %144 : f32 to vector<8x128xf32>
    %146 = arith.mulf %145, %139 : vector<8x128xf32>
    %147 = arith.addf %114, %146 : vector<8x128xf32>
    %c33 = arith.constant 33 : index
    %148 = memref.load %arg1[%c33] : memref<96xf32, #tpu.memory_space<smem>>
    %149 = vector.broadcast %148 : f32 to vector<8x128xf32>
    %150 = arith.mulf %149, %139 : vector<8x128xf32>
    %151 = arith.addf %118, %150 : vector<8x128xf32>
    %c45 = arith.constant 45 : index
    %152 = memref.load %arg1[%c45] : memref<96xf32, #tpu.memory_space<smem>>
    %153 = vector.broadcast %152 : f32 to vector<8x128xf32>
    %154 = arith.mulf %153, %139 : vector<8x128xf32>
    %155 = arith.addf %122, %154 : vector<8x128xf32>
    %c57 = arith.constant 57 : index
    %156 = memref.load %arg1[%c57] : memref<96xf32, #tpu.memory_space<smem>>
    %157 = vector.broadcast %156 : f32 to vector<8x128xf32>
    %158 = arith.mulf %157, %139 : vector<8x128xf32>
    %159 = arith.addf %126, %158 : vector<8x128xf32>
    %c69 = arith.constant 69 : index
    %160 = memref.load %arg1[%c69] : memref<96xf32, #tpu.memory_space<smem>>
    %161 = vector.broadcast %160 : f32 to vector<8x128xf32>
    %162 = arith.mulf %161, %139 : vector<8x128xf32>
    %163 = arith.addf %130, %162 : vector<8x128xf32>
    %c81 = arith.constant 81 : index
    %164 = memref.load %arg1[%c81] : memref<96xf32, #tpu.memory_space<smem>>
    %165 = vector.broadcast %164 : f32 to vector<8x128xf32>
    %166 = arith.mulf %165, %139 : vector<8x128xf32>
    %167 = arith.addf %134, %166 : vector<8x128xf32>
    %c93 = arith.constant 93 : index
    %168 = memref.load %arg1[%c93] : memref<96xf32, #tpu.memory_space<smem>>
    %169 = vector.broadcast %168 : f32 to vector<8x128xf32>
    %170 = arith.mulf %169, %139 : vector<8x128xf32>
    %171 = arith.addf %138, %170 : vector<8x128xf32>
    %172 = vector.extract_strided_slice %0 {offsets = [0, 0], sizes = [8, 128], strides = [1, 1]} : vector<8x512xf32> to vector<8x128xf32>
    %c1 = arith.constant 1 : index
    %173 = memref.load %arg1[%c1] : memref<96xf32, #tpu.memory_space<smem>>
    %174 = vector.broadcast %173 : f32 to vector<8x128xf32>
    %175 = arith.mulf %174, %172 : vector<8x128xf32>
    %176 = arith.addf %143, %175 : vector<8x128xf32>
    %c13 = arith.constant 13 : index
    %177 = memref.load %arg1[%c13] : memref<96xf32, #tpu.memory_space<smem>>
    %178 = vector.broadcast %177 : f32 to vector<8x128xf32>
    %179 = arith.mulf %178, %172 : vector<8x128xf32>
    %180 = arith.addf %147, %179 : vector<8x128xf32>
    %c25 = arith.constant 25 : index
    %181 = memref.load %arg1[%c25] : memref<96xf32, #tpu.memory_space<smem>>
    %182 = vector.broadcast %181 : f32 to vector<8x128xf32>
    %183 = arith.mulf %182, %172 : vector<8x128xf32>
    %184 = arith.addf %151, %183 : vector<8x128xf32>
    %c37 = arith.constant 37 : index
    %185 = memref.load %arg1[%c37] : memref<96xf32, #tpu.memory_space<smem>>
    %186 = vector.broadcast %185 : f32 to vector<8x128xf32>
    %187 = arith.mulf %186, %172 : vector<8x128xf32>
    %188 = arith.addf %155, %187 : vector<8x128xf32>
    %c49 = arith.constant 49 : index
    %189 = memref.load %arg1[%c49] : memref<96xf32, #tpu.memory_space<smem>>
    %190 = vector.broadcast %189 : f32 to vector<8x128xf32>
    %191 = arith.mulf %190, %172 : vector<8x128xf32>
    %192 = arith.addf %159, %191 : vector<8x128xf32>
    %c61 = arith.constant 61 : index
    %193 = memref.load %arg1[%c61] : memref<96xf32, #tpu.memory_space<smem>>
    %194 = vector.broadcast %193 : f32 to vector<8x128xf32>
    %195 = arith.mulf %194, %172 : vector<8x128xf32>
    %196 = arith.addf %163, %195 : vector<8x128xf32>
    %c73 = arith.constant 73 : index
    %197 = memref.load %arg1[%c73] : memref<96xf32, #tpu.memory_space<smem>>
    %198 = vector.broadcast %197 : f32 to vector<8x128xf32>
    %199 = arith.mulf %198, %172 : vector<8x128xf32>
    %200 = arith.addf %167, %199 : vector<8x128xf32>
    %c85 = arith.constant 85 : index
    %201 = memref.load %arg1[%c85] : memref<96xf32, #tpu.memory_space<smem>>
    %202 = vector.broadcast %201 : f32 to vector<8x128xf32>
    %203 = arith.mulf %202, %172 : vector<8x128xf32>
    %204 = arith.addf %171, %203 : vector<8x128xf32>
    %205 = vector.extract_strided_slice %0 {offsets = [0, 128], sizes = [8, 128], strides = [1, 1]} : vector<8x512xf32> to vector<8x128xf32>
    %c4 = arith.constant 4 : index
    %206 = memref.load %arg1[%c4] : memref<96xf32, #tpu.memory_space<smem>>
    %207 = vector.broadcast %206 : f32 to vector<8x128xf32>
    %208 = arith.mulf %207, %205 : vector<8x128xf32>
    %209 = arith.addf %176, %208 : vector<8x128xf32>
    %c16 = arith.constant 16 : index
    %210 = memref.load %arg1[%c16] : memref<96xf32, #tpu.memory_space<smem>>
    %211 = vector.broadcast %210 : f32 to vector<8x128xf32>
    %212 = arith.mulf %211, %205 : vector<8x128xf32>
    %213 = arith.addf %180, %212 : vector<8x128xf32>
    %c28 = arith.constant 28 : index
    %214 = memref.load %arg1[%c28] : memref<96xf32, #tpu.memory_space<smem>>
    %215 = vector.broadcast %214 : f32 to vector<8x128xf32>
    %216 = arith.mulf %215, %205 : vector<8x128xf32>
    %217 = arith.addf %184, %216 : vector<8x128xf32>
    %c40 = arith.constant 40 : index
    %218 = memref.load %arg1[%c40] : memref<96xf32, #tpu.memory_space<smem>>
    %219 = vector.broadcast %218 : f32 to vector<8x128xf32>
    %220 = arith.mulf %219, %205 : vector<8x128xf32>
    %221 = arith.addf %188, %220 : vector<8x128xf32>
    %c52 = arith.constant 52 : index
    %222 = memref.load %arg1[%c52] : memref<96xf32, #tpu.memory_space<smem>>
    %223 = vector.broadcast %222 : f32 to vector<8x128xf32>
    %224 = arith.mulf %223, %205 : vector<8x128xf32>
    %225 = arith.addf %192, %224 : vector<8x128xf32>
    %c64 = arith.constant 64 : index
    %226 = memref.load %arg1[%c64] : memref<96xf32, #tpu.memory_space<smem>>
    %227 = vector.broadcast %226 : f32 to vector<8x128xf32>
    %228 = arith.mulf %227, %205 : vector<8x128xf32>
    %229 = arith.addf %196, %228 : vector<8x128xf32>
    %c76 = arith.constant 76 : index
    %230 = memref.load %arg1[%c76] : memref<96xf32, #tpu.memory_space<smem>>
    %231 = vector.broadcast %230 : f32 to vector<8x128xf32>
    %232 = arith.mulf %231, %205 : vector<8x128xf32>
    %233 = arith.addf %200, %232 : vector<8x128xf32>
    %c88 = arith.constant 88 : index
    %234 = memref.load %arg1[%c88] : memref<96xf32, #tpu.memory_space<smem>>
    %235 = vector.broadcast %234 : f32 to vector<8x128xf32>
    %236 = arith.mulf %235, %205 : vector<8x128xf32>
    %237 = arith.addf %204, %236 : vector<8x128xf32>
    %238 = vector.extract_strided_slice %0 {offsets = [0, 256], sizes = [8, 128], strides = [1, 1]} : vector<8x512xf32> to vector<8x128xf32>
    %c7 = arith.constant 7 : index
    %239 = memref.load %arg1[%c7] : memref<96xf32, #tpu.memory_space<smem>>
    %240 = vector.broadcast %239 : f32 to vector<8x128xf32>
    %241 = arith.mulf %240, %238 : vector<8x128xf32>
    %242 = arith.addf %209, %241 : vector<8x128xf32>
    %c19 = arith.constant 19 : index
    %243 = memref.load %arg1[%c19] : memref<96xf32, #tpu.memory_space<smem>>
    %244 = vector.broadcast %243 : f32 to vector<8x128xf32>
    %245 = arith.mulf %244, %238 : vector<8x128xf32>
    %246 = arith.addf %213, %245 : vector<8x128xf32>
    %c31 = arith.constant 31 : index
    %247 = memref.load %arg1[%c31] : memref<96xf32, #tpu.memory_space<smem>>
    %248 = vector.broadcast %247 : f32 to vector<8x128xf32>
    %249 = arith.mulf %248, %238 : vector<8x128xf32>
    %250 = arith.addf %217, %249 : vector<8x128xf32>
    %c43 = arith.constant 43 : index
    %251 = memref.load %arg1[%c43] : memref<96xf32, #tpu.memory_space<smem>>
    %252 = vector.broadcast %251 : f32 to vector<8x128xf32>
    %253 = arith.mulf %252, %238 : vector<8x128xf32>
    %254 = arith.addf %221, %253 : vector<8x128xf32>
    %c55 = arith.constant 55 : index
    %255 = memref.load %arg1[%c55] : memref<96xf32, #tpu.memory_space<smem>>
    %256 = vector.broadcast %255 : f32 to vector<8x128xf32>
    %257 = arith.mulf %256, %238 : vector<8x128xf32>
    %258 = arith.addf %225, %257 : vector<8x128xf32>
    %c67 = arith.constant 67 : index
    %259 = memref.load %arg1[%c67] : memref<96xf32, #tpu.memory_space<smem>>
    %260 = vector.broadcast %259 : f32 to vector<8x128xf32>
    %261 = arith.mulf %260, %238 : vector<8x128xf32>
    %262 = arith.addf %229, %261 : vector<8x128xf32>
    %c79 = arith.constant 79 : index
    %263 = memref.load %arg1[%c79] : memref<96xf32, #tpu.memory_space<smem>>
    %264 = vector.broadcast %263 : f32 to vector<8x128xf32>
    %265 = arith.mulf %264, %238 : vector<8x128xf32>
    %266 = arith.addf %233, %265 : vector<8x128xf32>
    %c91 = arith.constant 91 : index
    %267 = memref.load %arg1[%c91] : memref<96xf32, #tpu.memory_space<smem>>
    %268 = vector.broadcast %267 : f32 to vector<8x128xf32>
    %269 = arith.mulf %268, %238 : vector<8x128xf32>
    %270 = arith.addf %237, %269 : vector<8x128xf32>
    %271 = vector.extract_strided_slice %0 {offsets = [0, 384], sizes = [8, 128], strides = [1, 1]} : vector<8x512xf32> to vector<8x128xf32>
    %c10 = arith.constant 10 : index
    %272 = memref.load %arg1[%c10] : memref<96xf32, #tpu.memory_space<smem>>
    %273 = vector.broadcast %272 : f32 to vector<8x128xf32>
    %274 = arith.mulf %273, %271 : vector<8x128xf32>
    %275 = arith.addf %242, %274 : vector<8x128xf32>
    %c22 = arith.constant 22 : index
    %276 = memref.load %arg1[%c22] : memref<96xf32, #tpu.memory_space<smem>>
    %277 = vector.broadcast %276 : f32 to vector<8x128xf32>
    %278 = arith.mulf %277, %271 : vector<8x128xf32>
    %279 = arith.addf %246, %278 : vector<8x128xf32>
    %c34 = arith.constant 34 : index
    %280 = memref.load %arg1[%c34] : memref<96xf32, #tpu.memory_space<smem>>
    %281 = vector.broadcast %280 : f32 to vector<8x128xf32>
    %282 = arith.mulf %281, %271 : vector<8x128xf32>
    %283 = arith.addf %250, %282 : vector<8x128xf32>
    %c46 = arith.constant 46 : index
    %284 = memref.load %arg1[%c46] : memref<96xf32, #tpu.memory_space<smem>>
    %285 = vector.broadcast %284 : f32 to vector<8x128xf32>
    %286 = arith.mulf %285, %271 : vector<8x128xf32>
    %287 = arith.addf %254, %286 : vector<8x128xf32>
    %c58 = arith.constant 58 : index
    %288 = memref.load %arg1[%c58] : memref<96xf32, #tpu.memory_space<smem>>
    %289 = vector.broadcast %288 : f32 to vector<8x128xf32>
    %290 = arith.mulf %289, %271 : vector<8x128xf32>
    %291 = arith.addf %258, %290 : vector<8x128xf32>
    %c70 = arith.constant 70 : index
    %292 = memref.load %arg1[%c70] : memref<96xf32, #tpu.memory_space<smem>>
    %293 = vector.broadcast %292 : f32 to vector<8x128xf32>
    %294 = arith.mulf %293, %271 : vector<8x128xf32>
    %295 = arith.addf %262, %294 : vector<8x128xf32>
    %c82 = arith.constant 82 : index
    %296 = memref.load %arg1[%c82] : memref<96xf32, #tpu.memory_space<smem>>
    %297 = vector.broadcast %296 : f32 to vector<8x128xf32>
    %298 = arith.mulf %297, %271 : vector<8x128xf32>
    %299 = arith.addf %266, %298 : vector<8x128xf32>
    %c94 = arith.constant 94 : index
    %300 = memref.load %arg1[%c94] : memref<96xf32, #tpu.memory_space<smem>>
    %301 = vector.broadcast %300 : f32 to vector<8x128xf32>
    %302 = arith.mulf %301, %271 : vector<8x128xf32>
    %303 = arith.addf %270, %302 : vector<8x128xf32>
    %c511_i32 = arith.constant 511 : i32
    %304 = tpu.dynamic_rotate %0 by %c511_i32 dim 1 : vector<8x512xf32>, i32 -> vector<8x512xf32>
    %c1_i32_17 = arith.constant 1 : i32
    %305 = vector.broadcast %c1_i32_17 : i32 to vector<1x512xi32>
    %306 = arith.addi %17, %305 : vector<1x512xi32>
    %c0_i32_18 = arith.constant 0 : i32
    %307 = vector.broadcast %c0_i32_18 : i32 to vector<1x512xi32>
    %308 = arith.cmpi sge, %306, %307 : vector<1x512xi32>
    %c1_i32_19 = arith.constant 1 : i32
    %309 = vector.broadcast %c1_i32_19 : i32 to vector<1x512xi32>
    %310 = arith.addi %17, %309 : vector<1x512xi32>
    %c128_i32_20 = arith.constant 128 : i32
    %311 = vector.broadcast %c128_i32_20 : i32 to vector<1x512xi32>
    %312 = arith.cmpi slt, %310, %311 : vector<1x512xi32>
    %313 = arith.andi %308, %312 : vector<1x512xi1>
    %cst_21 = arith.constant 0.000000e+00 : f32
    %314 = vector.shape_cast %313 : vector<1x512xi1> to vector<1x512xi1>
    %315 = vector.broadcast %314 : vector<1x512xi1> to vector<8x512xi1>
    %316 = vector.broadcast %cst_21 : f32 to vector<8x512xf32>
    %317 = arith.select %315, %304, %316 : vector<8x512xi1>, vector<8x512xf32>
    %318 = vector.extract_strided_slice %317 {offsets = [0, 0], sizes = [8, 128], strides = [1, 1]} : vector<8x512xf32> to vector<8x128xf32>
    %c2 = arith.constant 2 : index
    %319 = memref.load %arg1[%c2] : memref<96xf32, #tpu.memory_space<smem>>
    %320 = vector.broadcast %319 : f32 to vector<8x128xf32>
    %321 = arith.mulf %320, %318 : vector<8x128xf32>
    %322 = arith.addf %275, %321 : vector<8x128xf32>
    %c14 = arith.constant 14 : index
    %323 = memref.load %arg1[%c14] : memref<96xf32, #tpu.memory_space<smem>>
    %324 = vector.broadcast %323 : f32 to vector<8x128xf32>
    %325 = arith.mulf %324, %318 : vector<8x128xf32>
    %326 = arith.addf %279, %325 : vector<8x128xf32>
    %c26 = arith.constant 26 : index
    %327 = memref.load %arg1[%c26] : memref<96xf32, #tpu.memory_space<smem>>
    %328 = vector.broadcast %327 : f32 to vector<8x128xf32>
    %329 = arith.mulf %328, %318 : vector<8x128xf32>
    %330 = arith.addf %283, %329 : vector<8x128xf32>
    %c38 = arith.constant 38 : index
    %331 = memref.load %arg1[%c38] : memref<96xf32, #tpu.memory_space<smem>>
    %332 = vector.broadcast %331 : f32 to vector<8x128xf32>
    %333 = arith.mulf %332, %318 : vector<8x128xf32>
    %334 = arith.addf %287, %333 : vector<8x128xf32>
    %c50 = arith.constant 50 : index
    %335 = memref.load %arg1[%c50] : memref<96xf32, #tpu.memory_space<smem>>
    %336 = vector.broadcast %335 : f32 to vector<8x128xf32>
    %337 = arith.mulf %336, %318 : vector<8x128xf32>
    %338 = arith.addf %291, %337 : vector<8x128xf32>
    %c62 = arith.constant 62 : index
    %339 = memref.load %arg1[%c62] : memref<96xf32, #tpu.memory_space<smem>>
    %340 = vector.broadcast %339 : f32 to vector<8x128xf32>
    %341 = arith.mulf %340, %318 : vector<8x128xf32>
    %342 = arith.addf %295, %341 : vector<8x128xf32>
    %c74 = arith.constant 74 : index
    %343 = memref.load %arg1[%c74] : memref<96xf32, #tpu.memory_space<smem>>
    %344 = vector.broadcast %343 : f32 to vector<8x128xf32>
    %345 = arith.mulf %344, %318 : vector<8x128xf32>
    %346 = arith.addf %299, %345 : vector<8x128xf32>
    %c86 = arith.constant 86 : index
    %347 = memref.load %arg1[%c86] : memref<96xf32, #tpu.memory_space<smem>>
    %348 = vector.broadcast %347 : f32 to vector<8x128xf32>
    %349 = arith.mulf %348, %318 : vector<8x128xf32>
    %350 = arith.addf %303, %349 : vector<8x128xf32>
    %351 = vector.extract_strided_slice %317 {offsets = [0, 128], sizes = [8, 128], strides = [1, 1]} : vector<8x512xf32> to vector<8x128xf32>
    %c5 = arith.constant 5 : index
    %352 = memref.load %arg1[%c5] : memref<96xf32, #tpu.memory_space<smem>>
    %353 = vector.broadcast %352 : f32 to vector<8x128xf32>
    %354 = arith.mulf %353, %351 : vector<8x128xf32>
    %355 = arith.addf %322, %354 : vector<8x128xf32>
    %c17 = arith.constant 17 : index
    %356 = memref.load %arg1[%c17] : memref<96xf32, #tpu.memory_space<smem>>
    %357 = vector.broadcast %356 : f32 to vector<8x128xf32>
    %358 = arith.mulf %357, %351 : vector<8x128xf32>
    %359 = arith.addf %326, %358 : vector<8x128xf32>
    %c29 = arith.constant 29 : index
    %360 = memref.load %arg1[%c29] : memref<96xf32, #tpu.memory_space<smem>>
    %361 = vector.broadcast %360 : f32 to vector<8x128xf32>
    %362 = arith.mulf %361, %351 : vector<8x128xf32>
    %363 = arith.addf %330, %362 : vector<8x128xf32>
    %c41 = arith.constant 41 : index
    %364 = memref.load %arg1[%c41] : memref<96xf32, #tpu.memory_space<smem>>
    %365 = vector.broadcast %364 : f32 to vector<8x128xf32>
    %366 = arith.mulf %365, %351 : vector<8x128xf32>
    %367 = arith.addf %334, %366 : vector<8x128xf32>
    %c53 = arith.constant 53 : index
    %368 = memref.load %arg1[%c53] : memref<96xf32, #tpu.memory_space<smem>>
    %369 = vector.broadcast %368 : f32 to vector<8x128xf32>
    %370 = arith.mulf %369, %351 : vector<8x128xf32>
    %371 = arith.addf %338, %370 : vector<8x128xf32>
    %c65 = arith.constant 65 : index
    %372 = memref.load %arg1[%c65] : memref<96xf32, #tpu.memory_space<smem>>
    %373 = vector.broadcast %372 : f32 to vector<8x128xf32>
    %374 = arith.mulf %373, %351 : vector<8x128xf32>
    %375 = arith.addf %342, %374 : vector<8x128xf32>
    %c77 = arith.constant 77 : index
    %376 = memref.load %arg1[%c77] : memref<96xf32, #tpu.memory_space<smem>>
    %377 = vector.broadcast %376 : f32 to vector<8x128xf32>
    %378 = arith.mulf %377, %351 : vector<8x128xf32>
    %379 = arith.addf %346, %378 : vector<8x128xf32>
    %c89 = arith.constant 89 : index
    %380 = memref.load %arg1[%c89] : memref<96xf32, #tpu.memory_space<smem>>
    %381 = vector.broadcast %380 : f32 to vector<8x128xf32>
    %382 = arith.mulf %381, %351 : vector<8x128xf32>
    %383 = arith.addf %350, %382 : vector<8x128xf32>
    %384 = vector.extract_strided_slice %317 {offsets = [0, 256], sizes = [8, 128], strides = [1, 1]} : vector<8x512xf32> to vector<8x128xf32>
    %c8 = arith.constant 8 : index
    %385 = memref.load %arg1[%c8] : memref<96xf32, #tpu.memory_space<smem>>
    %386 = vector.broadcast %385 : f32 to vector<8x128xf32>
    %387 = arith.mulf %386, %384 : vector<8x128xf32>
    %388 = arith.addf %355, %387 : vector<8x128xf32>
    %c20 = arith.constant 20 : index
    %389 = memref.load %arg1[%c20] : memref<96xf32, #tpu.memory_space<smem>>
    %390 = vector.broadcast %389 : f32 to vector<8x128xf32>
    %391 = arith.mulf %390, %384 : vector<8x128xf32>
    %392 = arith.addf %359, %391 : vector<8x128xf32>
    %c32 = arith.constant 32 : index
    %393 = memref.load %arg1[%c32] : memref<96xf32, #tpu.memory_space<smem>>
    %394 = vector.broadcast %393 : f32 to vector<8x128xf32>
    %395 = arith.mulf %394, %384 : vector<8x128xf32>
    %396 = arith.addf %363, %395 : vector<8x128xf32>
    %c44 = arith.constant 44 : index
    %397 = memref.load %arg1[%c44] : memref<96xf32, #tpu.memory_space<smem>>
    %398 = vector.broadcast %397 : f32 to vector<8x128xf32>
    %399 = arith.mulf %398, %384 : vector<8x128xf32>
    %400 = arith.addf %367, %399 : vector<8x128xf32>
    %c56 = arith.constant 56 : index
    %401 = memref.load %arg1[%c56] : memref<96xf32, #tpu.memory_space<smem>>
    %402 = vector.broadcast %401 : f32 to vector<8x128xf32>
    %403 = arith.mulf %402, %384 : vector<8x128xf32>
    %404 = arith.addf %371, %403 : vector<8x128xf32>
    %c68 = arith.constant 68 : index
    %405 = memref.load %arg1[%c68] : memref<96xf32, #tpu.memory_space<smem>>
    %406 = vector.broadcast %405 : f32 to vector<8x128xf32>
    %407 = arith.mulf %406, %384 : vector<8x128xf32>
    %408 = arith.addf %375, %407 : vector<8x128xf32>
    %c80 = arith.constant 80 : index
    %409 = memref.load %arg1[%c80] : memref<96xf32, #tpu.memory_space<smem>>
    %410 = vector.broadcast %409 : f32 to vector<8x128xf32>
    %411 = arith.mulf %410, %384 : vector<8x128xf32>
    %412 = arith.addf %379, %411 : vector<8x128xf32>
    %c92 = arith.constant 92 : index
    %413 = memref.load %arg1[%c92] : memref<96xf32, #tpu.memory_space<smem>>
    %414 = vector.broadcast %413 : f32 to vector<8x128xf32>
    %415 = arith.mulf %414, %384 : vector<8x128xf32>
    %416 = arith.addf %383, %415 : vector<8x128xf32>
    %417 = vector.extract_strided_slice %317 {offsets = [0, 384], sizes = [8, 128], strides = [1, 1]} : vector<8x512xf32> to vector<8x128xf32>
    %c11 = arith.constant 11 : index
    %418 = memref.load %arg1[%c11] : memref<96xf32, #tpu.memory_space<smem>>
    %419 = vector.broadcast %418 : f32 to vector<8x128xf32>
    %420 = arith.mulf %419, %417 : vector<8x128xf32>
    %421 = arith.addf %388, %420 : vector<8x128xf32>
    %c23 = arith.constant 23 : index
    %422 = memref.load %arg1[%c23] : memref<96xf32, #tpu.memory_space<smem>>
    %423 = vector.broadcast %422 : f32 to vector<8x128xf32>
    %424 = arith.mulf %423, %417 : vector<8x128xf32>
    %425 = arith.addf %392, %424 : vector<8x128xf32>
    %c35 = arith.constant 35 : index
    %426 = memref.load %arg1[%c35] : memref<96xf32, #tpu.memory_space<smem>>
    %427 = vector.broadcast %426 : f32 to vector<8x128xf32>
    %428 = arith.mulf %427, %417 : vector<8x128xf32>
    %429 = arith.addf %396, %428 : vector<8x128xf32>
    %c47 = arith.constant 47 : index
    %430 = memref.load %arg1[%c47] : memref<96xf32, #tpu.memory_space<smem>>
    %431 = vector.broadcast %430 : f32 to vector<8x128xf32>
    %432 = arith.mulf %431, %417 : vector<8x128xf32>
    %433 = arith.addf %400, %432 : vector<8x128xf32>
    %c59 = arith.constant 59 : index
    %434 = memref.load %arg1[%c59] : memref<96xf32, #tpu.memory_space<smem>>
    %435 = vector.broadcast %434 : f32 to vector<8x128xf32>
    %436 = arith.mulf %435, %417 : vector<8x128xf32>
    %437 = arith.addf %404, %436 : vector<8x128xf32>
    %c71 = arith.constant 71 : index
    %438 = memref.load %arg1[%c71] : memref<96xf32, #tpu.memory_space<smem>>
    %439 = vector.broadcast %438 : f32 to vector<8x128xf32>
    %440 = arith.mulf %439, %417 : vector<8x128xf32>
    %441 = arith.addf %408, %440 : vector<8x128xf32>
    %c83 = arith.constant 83 : index
    %442 = memref.load %arg1[%c83] : memref<96xf32, #tpu.memory_space<smem>>
    %443 = vector.broadcast %442 : f32 to vector<8x128xf32>
    %444 = arith.mulf %443, %417 : vector<8x128xf32>
    %445 = arith.addf %412, %444 : vector<8x128xf32>
    %c95 = arith.constant 95 : index
    %446 = memref.load %arg1[%c95] : memref<96xf32, #tpu.memory_space<smem>>
    %447 = vector.broadcast %446 : f32 to vector<8x128xf32>
    %448 = arith.mulf %447, %417 : vector<8x128xf32>
    %449 = arith.addf %416, %448 : vector<8x128xf32>
    %c0_22 = arith.constant 0 : index
    %450 = memref.load %arg2[%c0_22] : memref<8xf32, #tpu.memory_space<smem>>
    %451 = vector.broadcast %450 : f32 to vector<8x128xf32>
    %452 = arith.addf %421, %451 : vector<8x128xf32>
    %cst_23 = arith.constant 0.000000e+00 : f32
    %453 = vector.broadcast %cst_23 : f32 to vector<8x128xf32>
    %454 = arith.maximumf %452, %453 : vector<8x128xf32>
    %c1_24 = arith.constant 1 : index
    %455 = memref.load %arg2[%c1_24] : memref<8xf32, #tpu.memory_space<smem>>
    %456 = vector.broadcast %455 : f32 to vector<8x128xf32>
    %457 = arith.addf %425, %456 : vector<8x128xf32>
    %cst_25 = arith.constant 0.000000e+00 : f32
    %458 = vector.broadcast %cst_25 : f32 to vector<8x128xf32>
    %459 = arith.maximumf %457, %458 : vector<8x128xf32>
    %c2_26 = arith.constant 2 : index
    %460 = memref.load %arg2[%c2_26] : memref<8xf32, #tpu.memory_space<smem>>
    %461 = vector.broadcast %460 : f32 to vector<8x128xf32>
    %462 = arith.addf %429, %461 : vector<8x128xf32>
    %cst_27 = arith.constant 0.000000e+00 : f32
    %463 = vector.broadcast %cst_27 : f32 to vector<8x128xf32>
    %464 = arith.maximumf %462, %463 : vector<8x128xf32>
    %c3_28 = arith.constant 3 : index
    %465 = memref.load %arg2[%c3_28] : memref<8xf32, #tpu.memory_space<smem>>
    %466 = vector.broadcast %465 : f32 to vector<8x128xf32>
    %467 = arith.addf %433, %466 : vector<8x128xf32>
    %cst_29 = arith.constant 0.000000e+00 : f32
    %468 = vector.broadcast %cst_29 : f32 to vector<8x128xf32>
    %469 = arith.maximumf %467, %468 : vector<8x128xf32>
    %c4_30 = arith.constant 4 : index
    %470 = memref.load %arg2[%c4_30] : memref<8xf32, #tpu.memory_space<smem>>
    %471 = vector.broadcast %470 : f32 to vector<8x128xf32>
    %472 = arith.addf %437, %471 : vector<8x128xf32>
    %cst_31 = arith.constant 0.000000e+00 : f32
    %473 = vector.broadcast %cst_31 : f32 to vector<8x128xf32>
    %474 = arith.maximumf %472, %473 : vector<8x128xf32>
    %c5_32 = arith.constant 5 : index
    %475 = memref.load %arg2[%c5_32] : memref<8xf32, #tpu.memory_space<smem>>
    %476 = vector.broadcast %475 : f32 to vector<8x128xf32>
    %477 = arith.addf %441, %476 : vector<8x128xf32>
    %cst_33 = arith.constant 0.000000e+00 : f32
    %478 = vector.broadcast %cst_33 : f32 to vector<8x128xf32>
    %479 = arith.maximumf %477, %478 : vector<8x128xf32>
    %c6_34 = arith.constant 6 : index
    %480 = memref.load %arg2[%c6_34] : memref<8xf32, #tpu.memory_space<smem>>
    %481 = vector.broadcast %480 : f32 to vector<8x128xf32>
    %482 = arith.addf %445, %481 : vector<8x128xf32>
    %cst_35 = arith.constant 0.000000e+00 : f32
    %483 = vector.broadcast %cst_35 : f32 to vector<8x128xf32>
    %484 = arith.maximumf %482, %483 : vector<8x128xf32>
    %c7_36 = arith.constant 7 : index
    %485 = memref.load %arg2[%c7_36] : memref<8xf32, #tpu.memory_space<smem>>
    %486 = vector.broadcast %485 : f32 to vector<8x128xf32>
    %487 = arith.addf %449, %486 : vector<8x128xf32>
    %cst_37 = arith.constant 0.000000e+00 : f32
    %488 = vector.broadcast %cst_37 : f32 to vector<8x128xf32>
    %489 = arith.maximumf %487, %488 : vector<8x128xf32>
    %490 = tpu.concatenate %454, %459, %464, %469, %474, %479, %484, %489 in 1 : vector<8x128xf32>, vector<8x128xf32>, vector<8x128xf32>, vector<8x128xf32>, vector<8x128xf32>, vector<8x128xf32>, vector<8x128xf32>, vector<8x128xf32> -> vector<8x1024xf32>
    %c0_38 = arith.constant 0 : index
    %c0_39 = arith.constant 0 : index
    %491 = vector.load %arg4[%c0_38, %c0_39] : memref<8x1024xf32, #tpu.memory_space<vmem>>, vector<8x1024xf32>
    tpu.vector_store %arg4[%c0_38, %c0_39], %490 {strides = array<i32>} : memref<8x1024xf32, #tpu.memory_space<vmem>>, vector<8x1024xf32>,
    return
  }
  func.func @transform_0(%arg0: i32) -> i32 {
    %c0_i32 = arith.constant 0 : i32
    %c0_i32_0 = arith.constant 0 : i32
    return %c0_i32 : i32
  }
  func.func @transform_1(%arg0: i32) -> i32 {
    %c0_i32 = arith.constant 0 : i32
    %c0_i32_0 = arith.constant 0 : i32
    return %c0_i32 : i32
  }
  func.func @transform_2(%arg0: i32) -> (i32, i32) {
    %c0_i32 = arith.constant 0 : i32
    %c0_i32_0 = arith.constant 0 : i32
    return %arg0, %c0_i32 : i32, i32
  }
  func.func @transform_3(%arg0: i32) -> (i32, i32) {
    %c0_i32 = arith.constant 0 : i32
    %c0_i32_0 = arith.constant 0 : i32
    return %arg0, %c0_i32 : i32, i32
  }
}

</mosaic_0001>

<llo_original>
// kernel: tpu_custom_call.1
$region0: #{tpu_custom_call.1}
  #allocation0 [shape = 'u32[]', space=smem, size = 0x4, offset = 0x4, fixed_abs, tag = 'smem constant byte address 0x4 - core index']
  #allocation1 [shape = 'u32[72,128]{1,0:T(1,128)}', space=vmem, size = 0x9000, scoped, tag = 'internal scratch']
  %s0 = inlined_call_operand.hbm [shape: f32[96], index: 0, kind: input, shape index: {}]
  %s1 = inlined_call_operand.hbm [shape: f32[8], index: 1, kind: input, shape index: {}]
  %s2 = inlined_call_operand.hbm [shape: f32[8,512], index: 2, kind: input, shape index: {}]
  %s3 = inlined_call_operand.hbm [shape: f32[8,1024], index: 3, kind: output, shape index: {}]
  %s4 = sld [smem:[#allocation0]]
  $region34: #{tpu_custom_call.1} parent=0
    _
  %s6 = ssub.s32 1, %s4
  %s7 = scalar_select 0, %s6, %s4
  $region1: #{tpu_custom_call.1} parent=0
    #allocation2 [shape = 'u8[512]{0}', space=smem, size = 0x200, scoped, tag = 'input window, operand 0, single buffered']
    #allocation3 [shape = 's32[1]{0}', space=sflag, size = 0x4, scoped, tag = 'scoped memory for tpu_custom_call.1']
    #allocation4 [shape = 's32[1]{0}', space=sflag, size = 0x4, scoped, tag = 'scoped memory for tpu_custom_call.1']
    #allocation5 [shape = 's32[1]{0}', space=sflag, size = 0x4, scoped, tag = 'scoped memory for tpu_custom_call.1']
    #allocation6 [shape = 'u8[512]{0}', space=smem, size = 0x200, scoped, tag = 'input window, operand 1, single buffered']
    #allocation7 [shape = 's32[1]{0}', space=sflag, size = 0x4, scoped, tag = 'scoped memory for tpu_custom_call.1']
    #allocation8 [shape = 'u8[16384]{0}', space=vmem, size = 0x4000, scoped, tag = 'input window, operand 2, single buffered']
    #allocation9 [shape = 'u8[32768]{0}', space=vmem, size = 0x8000, scoped, tag = 'output window, operand 0, single buffered']
    %8 = vsyncpa [#allocation5], 0
    %9 = vsyncpa [#allocation7], 0
    %10 = vsyncpa [#allocation3], 0
    %11 = vsyncpa [#allocation4], 0
    // Predicated region
    $region2: #{tpu_custom_call.1} parent=1 // pred_check
      _
    $region3: #{tpu_custom_call.1} parent=1 // pred_check_branch
      %13 = sbr.rel (0) target = $region5
    $region4: #{tpu_custom_call.1} parent=1 // pred_region
      %15 = vsyncadd [#allocation5], 0
      %s17 = sshll.u32 %s0, 4
      %s18 = int_to_ptr.hbm [resolvable:$true] %s17
      %20 = dma.hbm_to_smem %s18, 16, [#allocation2], [#allocation5]
    $region5: #{tpu_custom_call.1} parent=1 // pred_fallthru
      _
    // Predicated region
    $region6: #{tpu_custom_call.1} parent=1 // pred_check
      _
    $region7: #{tpu_custom_call.1} parent=1 // pred_check_branch
      %22 = sbr.rel (0) target = $region9
    $region8: #{tpu_custom_call.1} parent=1 // pred_region
      %24 = vsyncadd [#allocation7], 0
      %s26 = sshll.u32 %s1, 4
      %s27 = int_to_ptr.hbm [resolvable:$true] %s26
      %29 = dma.hbm_to_smem %s27, 16, [#allocation6], [#allocation7]
    $region9: #{tpu_custom_call.1} parent=1 // pred_fallthru
      _
    // Predicated region
    $region10: #{tpu_custom_call.1} parent=1 // pred_check
      _
    $region11: #{tpu_custom_call.1} parent=1 // pred_check_branch
      %31 = sbr.rel (0) target = $region13
    $region12: #{tpu_custom_call.1} parent=1 // pred_region
      %33 = vsyncadd [#allocation3], 0
      %s35 = sshll.u32 %s2, 4
      %s36 = int_to_ptr.hbm [resolvable:$true] %s35
      %s37 = sshll.u32 [#allocation8], 4
      %s38 = int_to_ptr.vmem [resolvable:$true] %s37
      %40 = dma.hbm_to_vmem [thread:$0]  %s36, 512, %s38, [#allocation3]
    $region13: #{tpu_custom_call.1} parent=1 // pred_fallthru
      _
    // Predicated region
    $region14: #{tpu_custom_call.1} parent=1 // pred_check
      _
    $region15: #{tpu_custom_call.1} parent=1 // pred_check_branch
      %42 = sbr.rel (0) target = $region17
    $region16: #{tpu_custom_call.1} parent=1 // pred_region
      %44 = dma.done [#allocation5], 16
    $region17: #{tpu_custom_call.1} parent=1 // pred_fallthru
      _
    // Predicated region
    $region18: #{tpu_custom_call.1} parent=1 // pred_check
      _
    $region19: #{tpu_custom_call.1} parent=1 // pred_check_branch
      %46 = sbr.rel (0) target = $region21
    $region20: #{tpu_custom_call.1} parent=1 // pred_region
      %48 = dma.done [#allocation7], 16
    $region21: #{tpu_custom_call.1} parent=1 // pred_fallthru
      _
    // Predicated region
    $region22: #{tpu_custom_call.1} parent=1 // pred_check
      _
    $region23: #{tpu_custom_call.1} parent=1 // pred_check_branch
      %50 = sbr.rel (0) target = $region25
    $region24: #{tpu_custom_call.1} parent=1 // pred_region
      %52 = dma.done [#allocation3], 512
    $region25: #{tpu_custom_call.1} parent=1 // pred_fallthru
      _
    %53 = sfence
    %v54 = vld [vmem:[#allocation8] sm:$0xff]
    %v55 = vld [vmem:[#allocation8 + $0x8] sm:$0xff]
    %v56 = vld [vmem:[#allocation8 + $0x10] sm:$0xff]
    %v57 = vld [vmem:[#allocation8 + $0x18] sm:$0xff]
    %v58 = vlaneseq
    %v59 = vand.u32 %v58, 127
    %v60 = vadd.s32 %v59, 128
    %v61 = vadd.s32 %v59, 256
    %v62 = vadd.s32 %v59, 384
    %vm63 = vcmp.lt.s32.totalorder %v59, 0
    %v64 = vsub.s32 0, %v59
    %v65 = vsel %vm63, %v64, %v59
    %v66 = vshrl.u32 %v65, 7
    %v67 = vand.u32 %v65, 127
    %v68 = vsub.s32 0, %v67
    %v69 = vsel %vm63, %v68, %v67
    %vm70 = vcmp.lt.s32.totalorder %v60, 0
    %v71 = vsub.s32 0, %v60
    %v72 = vsel %vm70, %v71, %v60
    %v73 = vshrl.u32 %v72, 7
    %v74 = vand.u32 %v72, 127
    %v75 = vsub.s32 0, %v74
    %v76 = vsel %vm70, %v75, %v74
    %vm77 = vcmp.lt.s32.totalorder %v61, 0
    %v78 = vsub.s32 0, %v61
    %v79 = vsel %vm77, %v78, %v61
    %v80 = vshrl.u32 %v79, 7
    %v81 = vand.u32 %v79, 127
    %v82 = vsub.s32 0, %v81
    %v83 = vsel %vm77, %v82, %v81
    %vm84 = vcmp.lt.s32.totalorder %v62, 0
    %v85 = vsub.s32 0, %v62
    %v86 = vsel %vm84, %v85, %v62
    %v87 = vshrl.u32 %v86, 7
    %v88 = vand.u32 %v86, 127
    %v89 = vsub.s32 0, %v88
    %v90 = vsel %vm84, %v89, %v88
    %vm91 = vcmp.ne.s32.totalorder %v69, 0
    %vm92 = vcmp.ne.s32.totalorder %v76, 0
    %vm93 = vcmp.ne.s32.totalorder %v83, 0
    %vm94 = vcmp.ne.s32.totalorder %v90, 0
    %vm95 = vcmp.lt.s32.totalorder %v69, 0
    %vm96 = vcmp.lt.s32.totalorder %v76, 0
    %vm97 = vcmp.lt.s32.totalorder %v83, 0
    %vm98 = vcmp.lt.s32.totalorder %v90, 0
    %vm99 = vmand %vm95, %vm91
    %vm100 = vmand %vm96, %vm92
    %vm101 = vmand %vm97, %vm93
    %vm102 = vmand %vm98, %vm94
    %v103 = vadd.s32 %v69, 128
    %v104 = vadd.s32 %v76, 128
    %v105 = vadd.s32 %v83, 128
    %v106 = vadd.s32 %v90, 128
    %v107 = vsel %vm99, %v103, %v69
    %v108 = vsel %vm100, %v104, %v76
    %v109 = vsel %vm101, %v105, %v83
    %v110 = vsel %vm102, %v106, %v90
    %111 = vrot.lane.b32.xlu0 %v54, 1
    %v112 = vpop.permute.xlu0 %111
    %113 = vrot.lane.b32.xlu0 %v55, 1
    %v114 = vpop.permute.xlu0 %113
    %115 = vrot.lane.b32.xlu0 %v56, 1
    %v116 = vpop.permute.xlu0 %115
    %117 = vrot.lane.b32.xlu0 %v57, 1
    %v118 = vpop.permute.xlu0 %117
    %vm119 = vcmp.lt.s32.totalorder %v59, 1
    %v120 = vsel %vm119, %v116, %v118
    %v121 = vsel %vm119, %v114, %v116
    %v122 = vsel %vm119, %v112, %v114
    %v123 = vsel %vm119, %v118, %v112
    %v124 = vadd.s32 %v107, 4294967295
    %v125 = vadd.s32 %v108, 4294967295
    %v126 = vadd.s32 %v109, 4294967295
    %v127 = vadd.s32 %v110, 4294967295
    %vm128 = vcmp.ge.s32.totalorder %v124, 0
    %vm129 = vcmp.ge.s32.totalorder %v125, 0
    %vm130 = vcmp.ge.s32.totalorder %v126, 0
    %vm131 = vcmp.ge.s32.totalorder %v127, 0
    %vm132 = vcmp.lt.s32.totalorder %v124, 128
    %vm133 = vcmp.lt.s32.totalorder %v125, 128
    %vm134 = vcmp.lt.s32.totalorder %v126, 128
    %vm135 = vcmp.lt.s32.totalorder %v127, 128
    %vm136 = vmand %vm128, %vm132
    %vm137 = vmand %vm129, %vm133
    %vm138 = vmand %vm130, %vm134
    %vm139 = vmand %vm131, %vm135
    %v140 = vsel %vm136, 1, 0
    %v141 = vsel %vm137, 1, 0
    %v142 = vsel %vm138, 1, 0
    %v143 = vsel %vm139, 1, 0
    %vm144 = vcmp.eq.s32.totalorder %v140, 1
    %vm145 = vcmp.eq.s32.totalorder %v141, 1
    %vm146 = vcmp.eq.s32.totalorder %v142, 1
    %vm147 = vcmp.eq.s32.totalorder %v143, 1
    %v148 = vsel %vm144, %v123, 0.0
    %v149 = vsel %vm145, %v122, 0.0
    %v150 = vsel %vm146, %v121, 0.0
    %v151 = vsel %vm147, %v120, 0.0
    %s152 = sld [smem:[#allocation2]]
    %v153 = vstv %s152
    %v154 = vmul.f32 %v153, %v148
    %v155 = vadd.f32 %v154, 0.0
    %s156 = sld [smem:[#allocation2 + $0xc]]
    %v157 = vstv %s156
    %v158 = vmul.f32 %v157, %v148
    %v159 = vadd.f32 %v158, 0.0
    %s160 = sld [smem:[#allocation2 + $0x18]]
    %v161 = vstv %s160
    %v162 = vmul.f32 %v161, %v148
    %v163 = vadd.f32 %v162, 0.0
    %s164 = sld [smem:[#allocation2 + $0x24]]
    %v165 = vstv %s164
    %v166 = vmul.f32 %v165, %v148
    %v167 = vadd.f32 %v166, 0.0
    %s168 = sld [smem:[#allocation2 + $0x30]]
    %v169 = vstv %s168
    %v170 = vmul.f32 %v169, %v148
    %v171 = vadd.f32 %v170, 0.0
    %s172 = sld [smem:[#allocation2 + $0x3c]]
    %v173 = vstv %s172
    %v174 = vmul.f32 %v173, %v148
    %v175 = vadd.f32 %v174, 0.0
    %s176 = sld [smem:[#allocation2 + $0x48]]
    %v177 = vstv %s176
    %v178 = vmul.f32 %v177, %v148
    %v179 = vadd.f32 %v178, 0.0
    %s180 = sld [smem:[#allocation2 + $0x54]]
    %v181 = vstv %s180
    %v182 = vmul.f32 %v181, %v148
    %v183 = vadd.f32 %v182, 0.0
    %s184 = sld [smem:[#allocation2 + $0x3]]
    %v185 = vstv %s184
    %v186 = vmul.f32 %v185, %v149
    %v187 = vadd.f32 %v155, %v186
    %s188 = sld [smem:[#allocation2 + $0xf]]
    %v189 = vstv %s188
    %v190 = vmul.f32 %v189, %v149
    %v191 = vadd.f32 %v159, %v190
    %s192 = sld [smem:[#allocation2 + $0x1b]]
    %v193 = vstv %s192
    %v194 = vmul.f32 %v193, %v149
    %v195 = vadd.f32 %v163, %v194
    %s196 = sld [smem:[#allocation2 + $0x27]]
    %v197 = vstv %s196
    %v198 = vmul.f32 %v197, %v149
    %v199 = vadd.f32 %v167, %v198
    %s200 = sld [smem:[#allocation2 + $0x33]]
    %v201 = vstv %s200
    %v202 = vmul.f32 %v201, %v149
    %v203 = vadd.f32 %v171, %v202
    %s204 = sld [smem:[#allocation2 + $0x3f]]
    %v205 = vstv %s204
    %v206 = vmul.f32 %v205, %v149
    %v207 = vadd.f32 %v175, %v206
    %s208 = sld [smem:[#allocation2 + $0x4b]]
    %v209 = vstv %s208
    %v210 = vmul.f32 %v209, %v149
    %v211 = vadd.f32 %v179, %v210
    %s212 = sld [smem:[#allocation2 + $0x57]]
    %v213 = vstv %s212
    %v214 = vmul.f32 %v213, %v149
    %v215 = vadd.f32 %v183, %v214
    %s216 = sld [smem:[#allocation2 + $0x6]]
    %v217 = vstv %s216
    %v218 = vmul.f32 %v217, %v150
    %v219 = vadd.f32 %v187, %v218
    %s220 = sld [smem:[#allocation2 + $0x12]]
    %v221 = vstv %s220
    %v222 = vmul.f32 %v221, %v150
    %v223 = vadd.f32 %v191, %v222
    %s224 = sld [smem:[#allocation2 + $0x1e]]
    %v225 = vstv %s224
    %v226 = vmul.f32 %v225, %v150
    %v227 = vadd.f32 %v195, %v226
    %s228 = sld [smem:[#allocation2 + $0x2a]]
    %v229 = vstv %s228
    %v230 = vmul.f32 %v229, %v150
    %v231 = vadd.f32 %v199, %v230
    %s232 = sld [smem:[#allocation2 + $0x36]]
    %v233 = vstv %s232
    %v234 = vmul.f32 %v233, %v150
    %v235 = vadd.f32 %v203, %v234
    %s236 = sld [smem:[#allocation2 + $0x42]]
    %v237 = vstv %s236
    %v238 = vmul.f32 %v237, %v150
    %v239 = vadd.f32 %v207, %v238
    %s240 = sld [smem:[#allocation2 + $0x4e]]
    %v241 = vstv %s240
    %v242 = vmul.f32 %v241, %v150
    %v243 = vadd.f32 %v211, %v242
    %s244 = sld [smem:[#allocation2 + $0x5a]]
    %v245 = vstv %s244
    %v246 = vmul.f32 %v245, %v150
    %v247 = vadd.f32 %v215, %v246
    %s248 = sld [smem:[#allocation2 + $0x9]]
    %v249 = vstv %s248
    %v250 = vmul.f32 %v249, %v151
    %v251 = vadd.f32 %v219, %v250
    %s252 = sld [smem:[#allocation2 + $0x15]]
    %v253 = vstv %s252
    %v254 = vmul.f32 %v253, %v151
    %v255 = vadd.f32 %v223, %v254
    %s256 = sld [smem:[#allocation2 + $0x21]]
    %v257 = vstv %s256
    %v258 = vmul.f32 %v257, %v151
    %v259 = vadd.f32 %v227, %v258
    %s260 = sld [smem:[#allocation2 + $0x2d]]
    %v261 = vstv %s260
    %v262 = vmul.f32 %v261, %v151
    %v263 = vadd.f32 %v231, %v262
    %s264 = sld [smem:[#allocation2 + $0x39]]
    %v265 = vstv %s264
    %v266 = vmul.f32 %v265, %v151
    %v267 = vadd.f32 %v235, %v266
    %s268 = sld [smem:[#allocation2 + $0x45]]
    %v269 = vstv %s268
    %v270 = vmul.f32 %v269, %v151
    %v271 = vadd.f32 %v239, %v270
    %s272 = sld [smem:[#allocation2 + $0x51]]
    %v273 = vstv %s272
    %v274 = vmul.f32 %v273, %v151
    %v275 = vadd.f32 %v243, %v274
    %s276 = sld [smem:[#allocation2 + $0x5d]]
    %v277 = vstv %s276
    %v278 = vmul.f32 %v277, %v151
    %v279 = vadd.f32 %v247, %v278
    %s280 = sld [smem:[#allocation2 + $0x1]]
    %v281 = vstv %s280
    %v282 = vmul.f32 %v281, %v54
    %v283 = vadd.f32 %v251, %v282
    %s284 = sld [smem:[#allocation2 + $0xd]]
    %v285 = vstv %s284
    %v286 = vmul.f32 %v285, %v54
    %v287 = vadd.f32 %v255, %v286
    %s288 = sld [smem:[#allocation2 + $0x19]]
    %v289 = vstv %s288
    %v290 = vmul.f32 %v289, %v54
    %v291 = vadd.f32 %v259, %v290
    %s292 = sld [smem:[#allocation2 + $0x25]]
    %v293 = vstv %s292
    %v294 = vmul.f32 %v293, %v54
    %v295 = vadd.f32 %v263, %v294
    %s296 = sld [smem:[#allocation2 + $0x31]]
    %v297 = vstv %s296
    %v298 = vmul.f32 %v297, %v54
    %v299 = vadd.f32 %v267, %v298
    %s300 = sld [smem:[#allocation2 + $0x3d]]
    %v301 = vstv %s300
    %v302 = vmul.f32 %v301, %v54
    %v303 = vadd.f32 %v271, %v302
    %s304 = sld [smem:[#allocation2 + $0x49]]
    %v305 = vstv %s304
    %v306 = vmul.f32 %v305, %v54
    %v307 = vadd.f32 %v275, %v306
    %s308 = sld [smem:[#allocation2 + $0x55]]
    %v309 = vstv %s308
    %v310 = vmul.f32 %v309, %v54
    %v311 = vadd.f32 %v279, %v310
    %s312 = sld [smem:[#allocation2 + $0x4]]
    %v313 = vstv %s312
    %v314 = vmul.f32 %v313, %v55
    %v315 = vadd.f32 %v283, %v314
    %s316 = sld [smem:[#allocation2 + $0x10]]
    %v317 = vstv %s316
    %v318 = vmul.f32 %v317, %v55
    %v319 = vadd.f32 %v287, %v318
    %s320 = sld [smem:[#allocation2 + $0x1c]]
    %v321 = vstv %s320
    %v322 = vmul.f32 %v321, %v55
    %v323 = vadd.f32 %v291, %v322
    %s324 = sld [smem:[#allocation2 + $0x28]]
    %v325 = vstv %s324
    %v326 = vmul.f32 %v325, %v55
    %v327 = vadd.f32 %v295, %v326
    %s328 = sld [smem:[#allocation2 + $0x34]]
    %v329 = vstv %s328
    %v330 = vmul.f32 %v329, %v55
    %v331 = vadd.f32 %v299, %v330
    %s332 = sld [smem:[#allocation2 + $0x40]]
    %v333 = vstv %s332
    %v334 = vmul.f32 %v333, %v55
    %v335 = vadd.f32 %v303, %v334
    %s336 = sld [smem:[#allocation2 + $0x4c]]
    %v337 = vstv %s336
    %v338 = vmul.f32 %v337, %v55
    %v339 = vadd.f32 %v307, %v338
    %s340 = sld [smem:[#allocation2 + $0x58]]
    %v341 = vstv %s340
    %v342 = vmul.f32 %v341, %v55
    %v343 = vadd.f32 %v311, %v342
    %s344 = sld [smem:[#allocation2 + $0x7]]
    %v345 = vstv %s344
    %v346 = vmul.f32 %v345, %v56
    %v347 = vadd.f32 %v315, %v346
    %s348 = sld [smem:[#allocation2 + $0x13]]
    %v349 = vstv %s348
    %v350 = vmul.f32 %v349, %v56
    %v351 = vadd.f32 %v319, %v350
    %s352 = sld [smem:[#allocation2 + $0x1f]]
    %v353 = vstv %s352
    %v354 = vmul.f32 %v353, %v56
    %v355 = vadd.f32 %v323, %v354
    %s356 = sld [smem:[#allocation2 + $0x2b]]
    %v357 = vstv %s356
    %v358 = vmul.f32 %v357, %v56
    %v359 = vadd.f32 %v327, %v358
    %s360 = sld [smem:[#allocation2 + $0x37]]
    %v361 = vstv %s360
    %v362 = vmul.f32 %v361, %v56
    %v363 = vadd.f32 %v331, %v362
    %s364 = sld [smem:[#allocation2 + $0x43]]
    %v365 = vstv %s364
    %v366 = vmul.f32 %v365, %v56
    %v367 = vadd.f32 %v335, %v366
    %s368 = sld [smem:[#allocation2 + $0x4f]]
    %v369 = vstv %s368
    %v370 = vmul.f32 %v369, %v56
    %v371 = vadd.f32 %v339, %v370
    %s372 = sld [smem:[#allocation2 + $0x5b]]
    %v373 = vstv %s372
    %v374 = vmul.f32 %v373, %v56
    %v375 = vadd.f32 %v343, %v374
    %s376 = sld [smem:[#allocation2 + $0xa]]
    %v377 = vstv %s376
    %v378 = vmul.f32 %v377, %v57
    %v379 = vadd.f32 %v347, %v378
    %s380 = sld [smem:[#allocation2 + $0x16]]
    %v381 = vstv %s380
    %v382 = vmul.f32 %v381, %v57
    %v383 = vadd.f32 %v351, %v382
    %s384 = sld [smem:[#allocation2 + $0x22]]
    %v385 = vstv %s384
    %v386 = vmul.f32 %v385, %v57
    %v387 = vadd.f32 %v355, %v386
    %s388 = sld [smem:[#allocation2 + $0x2e]]
    %v389 = vstv %s388
    %v390 = vmul.f32 %v389, %v57
    %v391 = vadd.f32 %v359, %v390
    %s392 = sld [smem:[#allocation2 + $0x3a]]
    %v393 = vstv %s392
    %v394 = vmul.f32 %v393, %v57
    %v395 = vadd.f32 %v363, %v394
    %s396 = sld [smem:[#allocation2 + $0x46]]
    %v397 = vstv %s396
    %v398 = vmul.f32 %v397, %v57
    %v399 = vadd.f32 %v367, %v398
    %s400 = sld [smem:[#allocation2 + $0x52]]
    %v401 = vstv %s400
    %v402 = vmul.f32 %v401, %v57
    %v403 = vadd.f32 %v371, %v402
    %s404 = sld [smem:[#allocation2 + $0x5e]]
    %v405 = vstv %s404
    %v406 = vmul.f32 %v405, %v57
    %v407 = vadd.f32 %v375, %v406
    %408 = vrot.lane.b32.xlu0 %v54, 127
    %v409 = vpop.permute.xlu0 %408
    %410 = vrot.lane.b32.xlu0 %v55, 127
    %v411 = vpop.permute.xlu0 %410
    %412 = vrot.lane.b32.xlu0 %v56, 127
    %v413 = vpop.permute.xlu0 %412
    %414 = vrot.lane.b32.xlu0 %v57, 127
    %v415 = vpop.permute.xlu0 %414
    %vm416 = vcmp.lt.s32.totalorder %v59, 127
    %v417 = vsel %vm416, %v413, %v415
    %v418 = vsel %vm416, %v411, %v413
    %v419 = vsel %vm416, %v409, %v411
    %v420 = vsel %vm416, %v415, %v409
    %v421 = vadd.s32 %v107, 1
    %v422 = vadd.s32 %v108, 1
    %v423 = vadd.s32 %v109, 1
    %v424 = vadd.s32 %v110, 1
    %vm425 = vcmp.ge.s32.totalorder %v421, 0
    %vm426 = vcmp.ge.s32.totalorder %v422, 0
    %vm427 = vcmp.ge.s32.totalorder %v423, 0
    %vm428 = vcmp.ge.s32.totalorder %v424, 0
    %vm429 = vcmp.lt.s32.totalorder %v421, 128
    %vm430 = vcmp.lt.s32.totalorder %v422, 128
    %vm431 = vcmp.lt.s32.totalorder %v423, 128
    %vm432 = vcmp.lt.s32.totalorder %v424, 128
    %vm433 = vmand %vm425, %vm429
    %vm434 = vmand %vm426, %vm430
    %vm435 = vmand %vm427, %vm431
    %vm436 = vmand %vm428, %vm432
    %v437 = vsel %vm433, 1, 0
    %v438 = vsel %vm434, 1, 0
    %v439 = vsel %vm435, 1, 0
    %v440 = vsel %vm436, 1, 0
    %vm441 = vcmp.eq.s32.totalorder %v437, 1
    %vm442 = vcmp.eq.s32.totalorder %v438, 1
    %vm443 = vcmp.eq.s32.totalorder %v439, 1
    %vm444 = vcmp.eq.s32.totalorder %v440, 1
    %v445 = vsel %vm441, %v419, 0.0
    %v446 = vsel %vm442, %v418, 0.0
    %v447 = vsel %vm443, %v417, 0.0
    %v448 = vsel %vm444, %v420, 0.0
    %s449 = sld [smem:[#allocation2 + $0x2]]
    %v450 = vstv %s449
    %v451 = vmul.f32 %v450, %v445
    %v452 = vadd.f32 %v379, %v451
    %s453 = sld [smem:[#allocation2 + $0xe]]
    %v454 = vstv %s453
    %v455 = vmul.f32 %v454, %v445
    %v456 = vadd.f32 %v383, %v455
    %s457 = sld [smem:[#allocation2 + $0x1a]]
    %v458 = vstv %s457
    %v459 = vmul.f32 %v458, %v445
    %v460 = vadd.f32 %v387, %v459
    %s461 = sld [smem:[#allocation2 + $0x26]]
    %v462 = vstv %s461
    %v463 = vmul.f32 %v462, %v445
    %v464 = vadd.f32 %v391, %v463
    %s465 = sld [smem:[#allocation2 + $0x32]]
    %v466 = vstv %s465
    %v467 = vmul.f32 %v466, %v445
    %v468 = vadd.f32 %v395, %v467
    %s469 = sld [smem:[#allocation2 + $0x3e]]
    %v470 = vstv %s469
    %v471 = vmul.f32 %v470, %v445
    %v472 = vadd.f32 %v399, %v471
    %s473 = sld [smem:[#allocation2 + $0x4a]]
    %v474 = vstv %s473
    %v475 = vmul.f32 %v474, %v445
    %v476 = vadd.f32 %v403, %v475
    %s477 = sld [smem:[#allocation2 + $0x56]]
    %v478 = vstv %s477
    %v479 = vmul.f32 %v478, %v445
    %v480 = vadd.f32 %v407, %v479
    %s481 = sld [smem:[#allocation2 + $0x5]]
    %v482 = vstv %s481
    %v483 = vmul.f32 %v482, %v446
    %v484 = vadd.f32 %v452, %v483
    %s485 = sld [smem:[#allocation2 + $0x11]]
    %v486 = vstv %s485
    %v487 = vmul.f32 %v486, %v446
    %v488 = vadd.f32 %v456, %v487
    %s489 = sld [smem:[#allocation2 + $0x1d]]
    %v490 = vstv %s489
    %v491 = vmul.f32 %v490, %v446
    %v492 = vadd.f32 %v460, %v491
    %s493 = sld [smem:[#allocation2 + $0x29]]
    %v494 = vstv %s493
    %v495 = vmul.f32 %v494, %v446
    %v496 = vadd.f32 %v464, %v495
    %s497 = sld [smem:[#allocation2 + $0x35]]
    %v498 = vstv %s497
    %v499 = vmul.f32 %v498, %v446
    %v500 = vadd.f32 %v468, %v499
    %s501 = sld [smem:[#allocation2 + $0x41]]
    %v502 = vstv %s501
    %v503 = vmul.f32 %v502, %v446
    %v504 = vadd.f32 %v472, %v503
    %s505 = sld [smem:[#allocation2 + $0x4d]]
    %v506 = vstv %s505
    %v507 = vmul.f32 %v506, %v446
    %v508 = vadd.f32 %v476, %v507
    %s509 = sld [smem:[#allocation2 + $0x59]]
    %v510 = vstv %s509
    %v511 = vmul.f32 %v510, %v446
    %v512 = vadd.f32 %v480, %v511
    %s513 = sld [smem:[#allocation2 + $0x8]]
    %v514 = vstv %s513
    %v515 = vmul.f32 %v514, %v447
    %v516 = vadd.f32 %v484, %v515
    %s517 = sld [smem:[#allocation2 + $0x14]]
    %v518 = vstv %s517
    %v519 = vmul.f32 %v518, %v447
    %v520 = vadd.f32 %v488, %v519
    %s521 = sld [smem:[#allocation2 + $0x20]]
    %v522 = vstv %s521
    %v523 = vmul.f32 %v522, %v447
    %v524 = vadd.f32 %v492, %v523
    %s525 = sld [smem:[#allocation2 + $0x2c]]
    %v526 = vstv %s525
    %v527 = vmul.f32 %v526, %v447
    %v528 = vadd.f32 %v496, %v527
    %s529 = sld [smem:[#allocation2 + $0x38]]
    %v530 = vstv %s529
    %v531 = vmul.f32 %v530, %v447
    %v532 = vadd.f32 %v500, %v531
    %s533 = sld [smem:[#allocation2 + $0x44]]
    %v534 = vstv %s533
    %v535 = vmul.f32 %v534, %v447
    %v536 = vadd.f32 %v504, %v535
    %s537 = sld [smem:[#allocation2 + $0x50]]
    %v538 = vstv %s537
    %v539 = vmul.f32 %v538, %v447
    %v540 = vadd.f32 %v508, %v539
    %s541 = sld [smem:[#allocation2 + $0x5c]]
    %v542 = vstv %s541
    %v543 = vmul.f32 %v542, %v447
    %v544 = vadd.f32 %v512, %v543
    %s545 = sld [smem:[#allocation2 + $0xb]]
    %v546 = vstv %s545
    %v547 = vmul.f32 %v546, %v448
    %v548 = vadd.f32 %v516, %v547
    %s549 = sld [smem:[#allocation2 + $0x17]]
    %v550 = vstv %s549
    %v551 = vmul.f32 %v550, %v448
    %v552 = vadd.f32 %v520, %v551
    %s553 = sld [smem:[#allocation2 + $0x23]]
    %v554 = vstv %s553
    %v555 = vmul.f32 %v554, %v448
    %v556 = vadd.f32 %v524, %v555
    %s557 = sld [smem:[#allocation2 + $0x2f]]
    %v558 = vstv %s557
    %v559 = vmul.f32 %v558, %v448
    %v560 = vadd.f32 %v528, %v559
    %s561 = sld [smem:[#allocation2 + $0x3b]]
    %v562 = vstv %s561
    %v563 = vmul.f32 %v562, %v448
    %v564 = vadd.f32 %v532, %v563
    %s565 = sld [smem:[#allocation2 + $0x47]]
    %v566 = vstv %s565
    %v567 = vmul.f32 %v566, %v448
    %v568 = vadd.f32 %v536, %v567
    %s569 = sld [smem:[#allocation2 + $0x53]]
    %v570 = vstv %s569
    %v571 = vmul.f32 %v570, %v448
    %v572 = vadd.f32 %v540, %v571
    %s573 = sld [smem:[#allocation2 + $0x5f]]
    %v574 = vstv %s573
    %v575 = vmul.f32 %v574, %v448
    %v576 = vadd.f32 %v544, %v575
    %s577 = sld [smem:[#allocation6]]
    %v578 = vstv %s577
    %v579 = vadd.f32 %v548, %v578
    %v580 = vmax.f32 %v579, 0.0
    %s581 = sld [smem:[#allocation6 + $0x1]]
    %v582 = vstv %s581
    %v583 = vadd.f32 %v552, %v582
    %v584 = vmax.f32 %v583, 0.0
    %s585 = sld [smem:[#allocation6 + $0x2]]
    %v586 = vstv %s585
    %v587 = vadd.f32 %v556, %v586
    %v588 = vmax.f32 %v587, 0.0
    %s589 = sld [smem:[#allocation6 + $0x3]]
    %v590 = vstv %s589
    %v591 = vadd.f32 %v560, %v590
    %v592 = vmax.f32 %v591, 0.0
    %s593 = sld [smem:[#allocation6 + $0x4]]
    %v594 = vstv %s593
    %v595 = vadd.f32 %v564, %v594
    %v596 = vmax.f32 %v595, 0.0
    %s597 = sld [smem:[#allocation6 + $0x5]]
    %v598 = vstv %s597
    %v599 = vadd.f32 %v568, %v598
    %v600 = vmax.f32 %v599, 0.0
    %s601 = sld [smem:[#allocation6 + $0x6]]
    %v602 = vstv %s601
    %v603 = vadd.f32 %v572, %v602
    %v604 = vmax.f32 %v603, 0.0
    %s605 = sld [smem:[#allocation6 + $0x7]]
    %v606 = vstv %s605
    %v607 = vadd.f32 %v576, %v606
    %v608 = vmax.f32 %v607, 0.0
    %609 = vst [vmem:[#allocation9] sm:$0xff] %v580
    %610 = vst [vmem:[#allocation9 + $0x8] sm:$0xff] %v584
    %611 = vst [vmem:[#allocation9 + $0x10] sm:$0xff] %v588
    %612 = vst [vmem:[#allocation9 + $0x18] sm:$0xff] %v592
    %613 = vst [vmem:[#allocation9 + $0x20] sm:$0xff] %v596
    %614 = vst [vmem:[#allocation9 + $0x28] sm:$0xff] %v600
    %615 = vst [vmem:[#allocation9 + $0x30] sm:$0xff] %v604
    %616 = vst [vmem:[#allocation9 + $0x38] sm:$0xff] %v608
    // Predicated region
    $region26: #{tpu_custom_call.1} parent=1 // pred_check
      _
    $region27: #{tpu_custom_call.1} parent=1 // pred_check_branch
      %618 = sbr.rel (0) target = $region29
    $region28: #{tpu_custom_call.1} parent=1 // pred_region
      %620 = vsyncadd [#allocation4], 0
      %s622 = sshll.u32 [#allocation9], 4
      %s623 = int_to_ptr.vmem [resolvable:$true] %s622
      %s624 = sshll.u32 %s3, 4
      %s625 = int_to_ptr.hbm [resolvable:$true] %s624
      %627 = dma.vmem_to_hbm [thread:$0]  %s623, 1024, %s625, [#allocation4]
    $region29: #{tpu_custom_call.1} parent=1 // pred_fallthru
      _
    // Predicated region
    $region30: #{tpu_custom_call.1} parent=1 // pred_check
      _
    $region31: #{tpu_custom_call.1} parent=1 // pred_check_branch
      %629 = sbr.rel (0) target = $region33
    $region32: #{tpu_custom_call.1} parent=1 // pred_region
      %631 = dma.done [#allocation4], 1024
    $region33: #{tpu_custom_call.1} parent=1 // pred_fallthru
      _
    %632 = vsyncpa [#allocation3], 1
    %633 = vsyncpa [#allocation4], 1
    %634 = vsyncpa [#allocation5], 1
    %635 = vsyncpa [#allocation7], 1

</llo_original>
